<compile_context>
chip_gen: v6e
topology: v6e:2x2x1
jax: 0.10.0
libtpu: 0.0.40
codegen_flags: <defaults>
</compile_context>

<pallas_src>
import jax
import jax.numpy as jnp
from jax.experimental import pallas as pl
from jax.experimental.pallas import tpu as pltpu


# ----------------------------------------------------------------------------
# Path A: token table resident in VMEM (small vocab).  Pure local gather + add.
# ----------------------------------------------------------------------------
def _embed_vmem_kernel(ids_ref,    # SMEM  (B*S,) int32  -- scalar prefetch
                       tok_ref,    # VMEM  (V, D)        -- whole table, resident
                       pos_ref,    # VMEM  (S, D)        -- first S rows of pos table
                       out_ref):   # VMEM  (T, D)        -- T = seqs_per_block * S rows
    i = pl.program_id(0)
    T, D = out_ref.shape
    S = pos_ref.shape[0]
    base = i * T
    # Static unroll over the T rows of this block: each row is a dynamic-sublane
    # vld from the resident table plus a VPU add (no DMA on the gather path).
    for j in range(T):
        tok_id = ids_ref[base + j]
        out_ref[pl.ds(j, 1), :] = (
            tok_ref[pl.ds(tok_id, 1), :] + pos_ref[pl.ds(j % S, 1), :])


# ----------------------------------------------------------------------------
# Path B: token table in HBM; per-row DMA gather, double-buffered across steps.
# ----------------------------------------------------------------------------
def _embed_hbm_kernel(ids_ref,    # SMEM  (B*S,) int32  -- scalar prefetch
                      tok_hbm,    # HBM   (V, D)        -- memory_space=pl.ANY
                      pos_ref,    # VMEM  (S, D)
                      out_ref,    # VMEM  (T, D)
                      tok_buf,    # VMEM  (2, T, D)     -- double-buffered gather
                      sems):      # DMA sems (2,)       -- one per slot
    i = pl.program_id(0)
    n = pl.num_programs(0)
    T, D = out_ref.shape
    S = pos_ref.shape[0]
    k = T // S

    def issue(step, slot):
        # Issue all T row-gather DMAs for `step` into buffer `slot`; all copies
        # of a slot share one DMA semaphore (review item: no (S,) sem array).
        for j in range(T):
            tok_id = ids_ref[step * T + j]
            pltpu.make_async_copy(
                tok_hbm.at[pl.ds(tok_id, 1), :],
                tok_buf.at[slot, pl.ds(j, 1), :],
                sems.at[slot]).start()

    # Prime slot 0 on the very first step.
    @pl.when(i == 0)
    def _prime():
        issue(0, 0)

    # Prefetch the NEXT step's rows before waiting on the current slot, so the
    # gather latency overlaps this step's compute/writeback.  Guarded so we
    # never read ids past B*S or issue stray DMAs on the last step.
    @pl.when(i + 1 < n)
    def _prefetch_next():
        issue(i + 1, (i + 1) % 2)

    # Wait for the current slot's T row copies (counted waits on the shared sem;
    # the src in the wait descriptor only fixes the per-copy size).
    slot = i % 2
    for j in range(T):
        pltpu.make_async_copy(
            tok_hbm.at[pl.ds(0, 1), :],
            tok_buf.at[slot, pl.ds(j, 1), :],
            sems.at[slot]).wait()

    gathered = tok_buf[slot]                 # (T, D)
    pos = pos_ref[...]                       # (S, D)
    if k == 1:
        out_ref[...] = gathered + pos
    else:
        out_ref[...] = (gathered.reshape(k, S, D) + pos[None]).reshape(T, D)


# ----------------------------------------------------------------------------
# Host wrapper.
# ----------------------------------------------------------------------------
def text_embedding(input_ids: jax.Array,
                   token_emb: jax.Array,
                   pos_emb: jax.Array,
                   *,
                   seqs_per_block: int | None = None,
                   table_vmem_budget_bytes: int = 16 * 1024 * 1024,
                   force_hbm_gather: bool = False) -> jax.Array:
    """input_ids: (B, S) int; token_emb: (V, D); pos_emb: (L, D) with S <= L."""
    B, S = input_ids.shape
    V, D = token_emb.shape
    L, D2 = pos_emb.shape
    assert D == D2 and S <= L
    assert S % 8 == 0 and D % 128 == 0, "pad S/D on the host first (see TODO)"

    # Rows (sequences) per grid step: amortize the ~0.35us/step overhead while
    # keeping the double-buffered scratch small.  Must divide B.
    if seqs_per_block is None:
        target_rows = 1024                     # ~0.5 MiB/block at D=128 f32
        kb = max(1, min(B, target_rows // S))
    else:
        kb = max(1, min(int(seqs_per_block), B))
    while B % kb:
        kb -= 1
    nb = B // kb
    T = kb * S                                 # rows per grid step

    # Clamp ids so padded / out-of-range ids can never drive an OOB row access.
    ids_flat = jnp.clip(input_ids.reshape(B * S), 0, V - 1).astype(jnp.int32)

    itemsize = jnp.dtype(token_emb.dtype).itemsize
    table_bytes = V * D * itemsize
    use_vmem_table = (not force_hbm_gather) and table_bytes <= table_vmem_budget_bytes

    if use_vmem_table:
        # VMEM-resident table: constant index_map => DMA'd once, stays resident.
        grid_spec = pltpu.PrefetchScalarGridSpec(
            num_scalar_prefetch=1,
            grid=(nb,),
            in_specs=[
                pl.BlockSpec((V, D), lambda i, ids: (0, 0)),   # whole token table
                pl.BlockSpec((S, D), lambda i, ids: (0, 0)),   # first S pos rows
            ],
            out_specs=pl.BlockSpec((T, D), lambda i, ids: (i, 0)),
        )
        kernel = _embed_vmem_kernel
        # Rough VMEM need (double-buffered in/out) with a safe floor/cap for v7x.
        need = 2 * (V * D + S * D + T * D) * itemsize + (1 << 20)
        compiler_params = pltpu.CompilerParams(
            dimension_semantics=("parallel",),                 # stateless -> shardable
            vmem_limit_bytes=int(min(max(need, 32 * 1024 * 1024),
                                     64 * 1024 * 1024)))
    else:
        # HBM gather with cross-step double buffering; the slot/semaphore state
        # is carried across steps, so the grid axis must be "arbitrary".
        grid_spec = pltpu.PrefetchScalarGridSpec(
            num_scalar_prefetch=1,
            grid=(nb,),
            in_specs=[
                pl.BlockSpec(memory_space=pl.ANY),             # token table in HBM
                pl.BlockSpec((S, D), lambda i, ids: (0, 0)),   # first S pos rows
            ],
            out_specs=pl.BlockSpec((T, D), lambda i, ids: (i, 0)),
            scratch_shapes=[
                pltpu.VMEM((2, T, D), token_emb.dtype),        # double-buffered rows
                pltpu.SemaphoreType.DMA((2,)),                 # one sem per slot
            ],
        )
        kernel = _embed_hbm_kernel
        compiler_params = pltpu.CompilerParams(
            dimension_semantics=("arbitrary",))

    out_flat = pl.pallas_call(
        kernel,
        out_shape=jax.ShapeDtypeStruct((B * S, D), token_emb.dtype),
        grid_spec=grid_spec,
        compiler_params=compiler_params,
    )(ids_flat, token_emb, pos_emb)

    # Free metadata reshape back to PyTorch's (B, S, D).
    return out_flat.reshape(B, S, D)


if __name__ == "__main__":
    # Small shapes consistent with the module: n_vocab=64, embed_dim=128, max_len=16.
    V, D, L = 64, 128, 16
    B, S = 2, 8

    key = jax.random.PRNGKey(0)
    k_tok, k_pos, k_ids = jax.random.split(key, 3)

    # nn.Embedding default init is N(0, 1).
    token_emb = jax.random.normal(k_tok, (V, D), dtype=jnp.float32)
    pos_emb = jax.random.normal(k_pos, (L, D), dtype=jnp.float32)
    input_ids = jax.random.randint(k_ids, (B, S), 0, V, dtype=jnp.int32)

    # Pure-JAX reference (matches PyTorch semantics exactly).
    ref = token_emb[input_ids] + pos_emb[:S][None, :, :]

    # Path A: VMEM-resident table (default for small vocab tables).
    out_vmem = jax.block_until_ready(text_embedding(input_ids, token_emb, pos_emb))
    assert out_vmem.shape == (B, S, D)
    assert out_vmem.dtype == jnp.float32
    assert jnp.allclose(out_vmem, ref, atol=1e-6), "VMEM-table path mismatch"

    # Path B: HBM row-gather with cross-step double buffering (large-vocab path);
    # forced here with one sequence per grid step so the prefetch pipeline runs.
    out_hbm = jax.block_until_ready(
        text_embedding(input_ids, token_emb, pos_emb,
                       force_hbm_gather=True, seqs_per_block=1))
    assert jnp.allclose(out_hbm, ref, atol=1e-6), "HBM-gather path mismatch"

    print("KERNEL_OK")
</pallas_src>

<mosaic_0001>
module attributes {stable_mosaic.version = 11 : i64} {
  func.func @_embed_vmem_kernel(%arg0: i32, %arg1: memref<16xi32, #tpu.memory_space<smem>>, %arg2: memref<64x128xf32, #tpu.memory_space<vmem>>, %arg3: memref<8x128xf32, #tpu.memory_space<vmem>>, %arg4: memref<16x128xf32, #tpu.memory_space<vmem>>) attributes {dimension_semantics = [#tpu.dimension_semantics<parallel>], iteration_bounds = array<i64: 1>, scalar_prefetch = 1 : i64, scratch_operands = 0 : i64, tpu.core_type = #tpu.core_type<tc>, window_params = [{pipeline_mode = #tpu.pipeline_mode<synchronous>, transform_indices = @transform_0, window_bounds = array<i64: 64, 128>}, {transform_indices = @transform_1, window_bounds = array<i64: 8, 128>}, {transform_indices = @transform_2, window_bounds = array<i64: 16, 128>}]} {
    %c16_i32 = arith.constant 16 : i32
    %0 = arith.muli %arg0, %c16_i32 : i32
    %c0_i32 = arith.constant 0 : i32
    %1 = arith.addi %0, %c0_i32 : i32
    %2 = arith.index_cast %1 : i32 to index
    %3 = memref.load %arg1[%2] : memref<16xi32, #tpu.memory_space<smem>>
    %4 = arith.index_cast %3 : i32 to index
    %c0 = arith.constant 0 : index
    %5 = vector.load %arg2[%4, %c0] : memref<64x128xf32, #tpu.memory_space<vmem>>, vector<1x128xf32>
    %c0_0 = arith.constant 0 : index
    %c0_1 = arith.constant 0 : index
    %6 = vector.load %arg3[%c0_0, %c0_1] : memref<8x128xf32, #tpu.memory_space<vmem>>, vector<1x128xf32>
    %7 = arith.addf %5, %6 : vector<1x128xf32>
    %c0_2 = arith.constant 0 : index
    %c0_3 = arith.constant 0 : index
    %8 = vector.load %arg4[%c0_2, %c0_3] : memref<16x128xf32, #tpu.memory_space<vmem>>, vector<1x128xf32>
    tpu.vector_store %arg4[%c0_2, %c0_3], %7 {strides = array<i32>} : memref<16x128xf32, #tpu.memory_space<vmem>>, vector<1x128xf32>,
    %c1_i32 = arith.constant 1 : i32
    %9 = arith.addi %0, %c1_i32 : i32
    %10 = arith.index_cast %9 : i32 to index
    %11 = memref.load %arg1[%10] : memref<16xi32, #tpu.memory_space<smem>>
    %12 = arith.index_cast %11 : i32 to index
    %c0_4 = arith.constant 0 : index
    %13 = vector.load %arg2[%12, %c0_4] : memref<64x128xf32, #tpu.memory_space<vmem>>, vector<1x128xf32>
    %c1 = arith.constant 1 : index
    %c0_5 = arith.constant 0 : index
    %14 = vector.load %arg3[%c1, %c0_5] : memref<8x128xf32, #tpu.memory_space<vmem>>, vector<1x128xf32>
    %15 = arith.addf %13, %14 : vector<1x128xf32>
    %c1_6 = arith.constant 1 : index
    %c0_7 = arith.constant 0 : index
    %16 = vector.load %arg4[%c1_6, %c0_7] : memref<16x128xf32, #tpu.memory_space<vmem>>, vector<1x128xf32>
    tpu.vector_store %arg4[%c1_6, %c0_7], %15 {strides = array<i32>} : memref<16x128xf32, #tpu.memory_space<vmem>>, vector<1x128xf32>,
    %c2_i32 = arith.constant 2 : i32
    %17 = arith.addi %0, %c2_i32 : i32
    %18 = arith.index_cast %17 : i32 to index
    %19 = memref.load %arg1[%18] : memref<16xi32, #tpu.memory_space<smem>>
    %20 = arith.index_cast %19 : i32 to index
    %c0_8 = arith.constant 0 : index
    %21 = vector.load %arg2[%20, %c0_8] : memref<64x128xf32, #tpu.memory_space<vmem>>, vector<1x128xf32>
    %c2 = arith.constant 2 : index
    %c0_9 = arith.constant 0 : index
    %22 = vector.load %arg3[%c2, %c0_9] : memref<8x128xf32, #tpu.memory_space<vmem>>, vector<1x128xf32>
    %23 = arith.addf %21, %22 : vector<1x128xf32>
    %c2_10 = arith.constant 2 : index
    %c0_11 = arith.constant 0 : index
    %24 = vector.load %arg4[%c2_10, %c0_11] : memref<16x128xf32, #tpu.memory_space<vmem>>, vector<1x128xf32>
    tpu.vector_store %arg4[%c2_10, %c0_11], %23 {strides = array<i32>} : memref<16x128xf32, #tpu.memory_space<vmem>>, vector<1x128xf32>,
    %c3_i32 = arith.constant 3 : i32
    %25 = arith.addi %0, %c3_i32 : i32
    %26 = arith.index_cast %25 : i32 to index
    %27 = memref.load %arg1[%26] : memref<16xi32, #tpu.memory_space<smem>>
    %28 = arith.index_cast %27 : i32 to index
    %c0_12 = arith.constant 0 : index
    %29 = vector.load %arg2[%28, %c0_12] : memref<64x128xf32, #tpu.memory_space<vmem>>, vector<1x128xf32>
    %c3 = arith.constant 3 : index
    %c0_13 = arith.constant 0 : index
    %30 = vector.load %arg3[%c3, %c0_13] : memref<8x128xf32, #tpu.memory_space<vmem>>, vector<1x128xf32>
    %31 = arith.addf %29, %30 : vector<1x128xf32>
    %c3_14 = arith.constant 3 : index
    %c0_15 = arith.constant 0 : index
    %32 = vector.load %arg4[%c3_14, %c0_15] : memref<16x128xf32, #tpu.memory_space<vmem>>, vector<1x128xf32>
    tpu.vector_store %arg4[%c3_14, %c0_15], %31 {strides = array<i32>} : memref<16x128xf32, #tpu.memory_space<vmem>>, vector<1x128xf32>,
    %c4_i32 = arith.constant 4 : i32
    %33 = arith.addi %0, %c4_i32 : i32
    %34 = arith.index_cast %33 : i32 to index
    %35 = memref.load %arg1[%34] : memref<16xi32, #tpu.memory_space<smem>>
    %36 = arith.index_cast %35 : i32 to index
    %c0_16 = arith.constant 0 : index
    %37 = vector.load %arg2[%36, %c0_16] : memref<64x128xf32, #tpu.memory_space<vmem>>, vector<1x128xf32>
    %c4 = arith.constant 4 : index
    %c0_17 = arith.constant 0 : index
    %38 = vector.load %arg3[%c4, %c0_17] : memref<8x128xf32, #tpu.memory_space<vmem>>, vector<1x128xf32>
    %39 = arith.addf %37, %38 : vector<1x128xf32>
    %c4_18 = arith.constant 4 : index
    %c0_19 = arith.constant 0 : index
    %40 = vector.load %arg4[%c4_18, %c0_19] : memref<16x128xf32, #tpu.memory_space<vmem>>, vector<1x128xf32>
    tpu.vector_store %arg4[%c4_18, %c0_19], %39 {strides = array<i32>} : memref<16x128xf32, #tpu.memory_space<vmem>>, vector<1x128xf32>,
    %c5_i32 = arith.constant 5 : i32
    %41 = arith.addi %0, %c5_i32 : i32
    %42 = arith.index_cast %41 : i32 to index
    %43 = memref.load %arg1[%42] : memref<16xi32, #tpu.memory_space<smem>>
    %44 = arith.index_cast %43 : i32 to index
    %c0_20 = arith.constant 0 : index
    %45 = vector.load %arg2[%44, %c0_20] : memref<64x128xf32, #tpu.memory_space<vmem>>, vector<1x128xf32>
    %c5 = arith.constant 5 : index
    %c0_21 = arith.constant 0 : index
    %46 = vector.load %arg3[%c5, %c0_21] : memref<8x128xf32, #tpu.memory_space<vmem>>, vector<1x128xf32>
    %47 = arith.addf %45, %46 : vector<1x128xf32>
    %c5_22 = arith.constant 5 : index
    %c0_23 = arith.constant 0 : index
    %48 = vector.load %arg4[%c5_22, %c0_23] : memref<16x128xf32, #tpu.memory_space<vmem>>, vector<1x128xf32>
    tpu.vector_store %arg4[%c5_22, %c0_23], %47 {strides = array<i32>} : memref<16x128xf32, #tpu.memory_space<vmem>>, vector<1x128xf32>,
    %c6_i32 = arith.constant 6 : i32
    %49 = arith.addi %0, %c6_i32 : i32
    %50 = arith.index_cast %49 : i32 to index
    %51 = memref.load %arg1[%50] : memref<16xi32, #tpu.memory_space<smem>>
    %52 = arith.index_cast %51 : i32 to index
    %c0_24 = arith.constant 0 : index
    %53 = vector.load %arg2[%52, %c0_24] : memref<64x128xf32, #tpu.memory_space<vmem>>, vector<1x128xf32>
    %c6 = arith.constant 6 : index
    %c0_25 = arith.constant 0 : index
    %54 = vector.load %arg3[%c6, %c0_25] : memref<8x128xf32, #tpu.memory_space<vmem>>, vector<1x128xf32>
    %55 = arith.addf %53, %54 : vector<1x128xf32>
    %c6_26 = arith.constant 6 : index
    %c0_27 = arith.constant 0 : index
    %56 = vector.load %arg4[%c6_26, %c0_27] : memref<16x128xf32, #tpu.memory_space<vmem>>, vector<1x128xf32>
    tpu.vector_store %arg4[%c6_26, %c0_27], %55 {strides = array<i32>} : memref<16x128xf32, #tpu.memory_space<vmem>>, vector<1x128xf32>,
    %c7_i32 = arith.constant 7 : i32
    %57 = arith.addi %0, %c7_i32 : i32
    %58 = arith.index_cast %57 : i32 to index
    %59 = memref.load %arg1[%58] : memref<16xi32, #tpu.memory_space<smem>>
    %60 = arith.index_cast %59 : i32 to index
    %c0_28 = arith.constant 0 : index
    %61 = vector.load %arg2[%60, %c0_28] : memref<64x128xf32, #tpu.memory_space<vmem>>, vector<1x128xf32>
    %c7 = arith.constant 7 : index
    %c0_29 = arith.constant 0 : index
    %62 = vector.load %arg3[%c7, %c0_29] : memref<8x128xf32, #tpu.memory_space<vmem>>, vector<1x128xf32>
    %63 = arith.addf %61, %62 : vector<1x128xf32>
    %c7_30 = arith.constant 7 : index
    %c0_31 = arith.constant 0 : index
    %64 = vector.load %arg4[%c7_30, %c0_31] : memref<16x128xf32, #tpu.memory_space<vmem>>, vector<1x128xf32>
    tpu.vector_store %arg4[%c7_30, %c0_31], %63 {strides = array<i32>} : memref<16x128xf32, #tpu.memory_space<vmem>>, vector<1x128xf32>,
    %c8_i32 = arith.constant 8 : i32
    %65 = arith.addi %0, %c8_i32 : i32
    %66 = arith.index_cast %65 : i32 to index
    %67 = memref.load %arg1[%66] : memref<16xi32, #tpu.memory_space<smem>>
    %68 = arith.index_cast %67 : i32 to index
    %c0_32 = arith.constant 0 : index
    %69 = vector.load %arg2[%68, %c0_32] : memref<64x128xf32, #tpu.memory_space<vmem>>, vector<1x128xf32>
    %c0_33 = arith.constant 0 : index
    %c0_34 = arith.constant 0 : index
    %70 = vector.load %arg3[%c0_33, %c0_34] : memref<8x128xf32, #tpu.memory_space<vmem>>, vector<1x128xf32>
    %71 = arith.addf %69, %70 : vector<1x128xf32>
    %c8 = arith.constant 8 : index
    %c0_35 = arith.constant 0 : index
    %72 = vector.load %arg4[%c8, %c0_35] : memref<16x128xf32, #tpu.memory_space<vmem>>, vector<1x128xf32>
    tpu.vector_store %arg4[%c8, %c0_35], %71 {strides = array<i32>} : memref<16x128xf32, #tpu.memory_space<vmem>>, vector<1x128xf32>,
    %c9_i32 = arith.constant 9 : i32
    %73 = arith.addi %0, %c9_i32 : i32
    %74 = arith.index_cast %73 : i32 to index
    %75 = memref.load %arg1[%74] : memref<16xi32, #tpu.memory_space<smem>>
    %76 = arith.index_cast %75 : i32 to index
    %c0_36 = arith.constant 0 : index
    %77 = vector.load %arg2[%76, %c0_36] : memref<64x128xf32, #tpu.memory_space<vmem>>, vector<1x128xf32>
    %c1_37 = arith.constant 1 : index
    %c0_38 = arith.constant 0 : index
    %78 = vector.load %arg3[%c1_37, %c0_38] : memref<8x128xf32, #tpu.memory_space<vmem>>, vector<1x128xf32>
    %79 = arith.addf %77, %78 : vector<1x128xf32>
    %c9 = arith.constant 9 : index
    %c0_39 = arith.constant 0 : index
    %80 = vector.load %arg4[%c9, %c0_39] : memref<16x128xf32, #tpu.memory_space<vmem>>, vector<1x128xf32>
    tpu.vector_store %arg4[%c9, %c0_39], %79 {strides = array<i32>} : memref<16x128xf32, #tpu.memory_space<vmem>>, vector<1x128xf32>,
    %c10_i32 = arith.constant 10 : i32
    %81 = arith.addi %0, %c10_i32 : i32
    %82 = arith.index_cast %81 : i32 to index
    %83 = memref.load %arg1[%82] : memref<16xi32, #tpu.memory_space<smem>>
    %84 = arith.index_cast %83 : i32 to index
    %c0_40 = arith.constant 0 : index
    %85 = vector.load %arg2[%84, %c0_40] : memref<64x128xf32, #tpu.memory_space<vmem>>, vector<1x128xf32>
    %c2_41 = arith.constant 2 : index
    %c0_42 = arith.constant 0 : index
    %86 = vector.load %arg3[%c2_41, %c0_42] : memref<8x128xf32, #tpu.memory_space<vmem>>, vector<1x128xf32>
    %87 = arith.addf %85, %86 : vector<1x128xf32>
    %c10 = arith.constant 10 : index
    %c0_43 = arith.constant 0 : index
    %88 = vector.load %arg4[%c10, %c0_43] : memref<16x128xf32, #tpu.memory_space<vmem>>, vector<1x128xf32>
    tpu.vector_store %arg4[%c10, %c0_43], %87 {strides = array<i32>} : memref<16x128xf32, #tpu.memory_space<vmem>>, vector<1x128xf32>,
    %c11_i32 = arith.constant 11 : i32
    %89 = arith.addi %0, %c11_i32 : i32
    %90 = arith.index_cast %89 : i32 to index
    %91 = memref.load %arg1[%90] : memref<16xi32, #tpu.memory_space<smem>>
    %92 = arith.index_cast %91 : i32 to index
    %c0_44 = arith.constant 0 : index
    %93 = vector.load %arg2[%92, %c0_44] : memref<64x128xf32, #tpu.memory_space<vmem>>, vector<1x128xf32>
    %c3_45 = arith.constant 3 : index
    %c0_46 = arith.constant 0 : index
    %94 = vector.load %arg3[%c3_45, %c0_46] : memref<8x128xf32, #tpu.memory_space<vmem>>, vector<1x128xf32>
    %95 = arith.addf %93, %94 : vector<1x128xf32>
    %c11 = arith.constant 11 : index
    %c0_47 = arith.constant 0 : index
    %96 = vector.load %arg4[%c11, %c0_47] : memref<16x128xf32, #tpu.memory_space<vmem>>, vector<1x128xf32>
    tpu.vector_store %arg4[%c11, %c0_47], %95 {strides = array<i32>} : memref<16x128xf32, #tpu.memory_space<vmem>>, vector<1x128xf32>,
    %c12_i32 = arith.constant 12 : i32
    %97 = arith.addi %0, %c12_i32 : i32
    %98 = arith.index_cast %97 : i32 to index
    %99 = memref.load %arg1[%98] : memref<16xi32, #tpu.memory_space<smem>>
    %100 = arith.index_cast %99 : i32 to index
    %c0_48 = arith.constant 0 : index
    %101 = vector.load %arg2[%100, %c0_48] : memref<64x128xf32, #tpu.memory_space<vmem>>, vector<1x128xf32>
    %c4_49 = arith.constant 4 : index
    %c0_50 = arith.constant 0 : index
    %102 = vector.load %arg3[%c4_49, %c0_50] : memref<8x128xf32, #tpu.memory_space<vmem>>, vector<1x128xf32>
    %103 = arith.addf %101, %102 : vector<1x128xf32>
    %c12 = arith.constant 12 : index
    %c0_51 = arith.constant 0 : index
    %104 = vector.load %arg4[%c12, %c0_51] : memref<16x128xf32, #tpu.memory_space<vmem>>, vector<1x128xf32>
    tpu.vector_store %arg4[%c12, %c0_51], %103 {strides = array<i32>} : memref<16x128xf32, #tpu.memory_space<vmem>>, vector<1x128xf32>,
    %c13_i32 = arith.constant 13 : i32
    %105 = arith.addi %0, %c13_i32 : i32
    %106 = arith.index_cast %105 : i32 to index
    %107 = memref.load %arg1[%106] : memref<16xi32, #tpu.memory_space<smem>>
    %108 = arith.index_cast %107 : i32 to index
    %c0_52 = arith.constant 0 : index
    %109 = vector.load %arg2[%108, %c0_52] : memref<64x128xf32, #tpu.memory_space<vmem>>, vector<1x128xf32>
    %c5_53 = arith.constant 5 : index
    %c0_54 = arith.constant 0 : index
    %110 = vector.load %arg3[%c5_53, %c0_54] : memref<8x128xf32, #tpu.memory_space<vmem>>, vector<1x128xf32>
    %111 = arith.addf %109, %110 : vector<1x128xf32>
    %c13 = arith.constant 13 : index
    %c0_55 = arith.constant 0 : index
    %112 = vector.load %arg4[%c13, %c0_55] : memref<16x128xf32, #tpu.memory_space<vmem>>, vector<1x128xf32>
    tpu.vector_store %arg4[%c13, %c0_55], %111 {strides = array<i32>} : memref<16x128xf32, #tpu.memory_space<vmem>>, vector<1x128xf32>,
    %c14_i32 = arith.constant 14 : i32
    %113 = arith.addi %0, %c14_i32 : i32
    %114 = arith.index_cast %113 : i32 to index
    %115 = memref.load %arg1[%114] : memref<16xi32, #tpu.memory_space<smem>>
    %116 = arith.index_cast %115 : i32 to index
    %c0_56 = arith.constant 0 : index
    %117 = vector.load %arg2[%116, %c0_56] : memref<64x128xf32, #tpu.memory_space<vmem>>, vector<1x128xf32>
    %c6_57 = arith.constant 6 : index
    %c0_58 = arith.constant 0 : index
    %118 = vector.load %arg3[%c6_57, %c0_58] : memref<8x128xf32, #tpu.memory_space<vmem>>, vector<1x128xf32>
    %119 = arith.addf %117, %118 : vector<1x128xf32>
    %c14 = arith.constant 14 : index
    %c0_59 = arith.constant 0 : index
    %120 = vector.load %arg4[%c14, %c0_59] : memref<16x128xf32, #tpu.memory_space<vmem>>, vector<1x128xf32>
    tpu.vector_store %arg4[%c14, %c0_59], %119 {strides = array<i32>} : memref<16x128xf32, #tpu.memory_space<vmem>>, vector<1x128xf32>,
    %c15_i32 = arith.constant 15 : i32
    %121 = arith.addi %0, %c15_i32 : i32
    %122 = arith.index_cast %121 : i32 to index
    %123 = memref.load %arg1[%122] : memref<16xi32, #tpu.memory_space<smem>>
    %124 = arith.index_cast %123 : i32 to index
    %c0_60 = arith.constant 0 : index
    %125 = vector.load %arg2[%124, %c0_60] : memref<64x128xf32, #tpu.memory_space<vmem>>, vector<1x128xf32>
    %c7_61 = arith.constant 7 : index
    %c0_62 = arith.constant 0 : index
    %126 = vector.load %arg3[%c7_61, %c0_62] : memref<8x128xf32, #tpu.memory_space<vmem>>, vector<1x128xf32>
    %127 = arith.addf %125, %126 : vector<1x128xf32>
    %c15 = arith.constant 15 : index
    %c0_63 = arith.constant 0 : index
    %128 = vector.load %arg4[%c15, %c0_63] : memref<16x128xf32, #tpu.memory_space<vmem>>, vector<1x128xf32>
    tpu.vector_store %arg4[%c15, %c0_63], %127 {strides = array<i32>} : memref<16x128xf32, #tpu.memory_space<vmem>>, vector<1x128xf32>,
    return
  }
  func.func @transform_0(%arg0: i32, %arg1: memref<16xi32, #tpu.memory_space<smem>>) -> (i32, i32) {
    %c0_i32 = arith.constant 0 : i32
    %c0_i32_0 = arith.constant 0 : i32
    %c0_i32_1 = arith.constant 0 : i32
    return %c0_i32, %c0_i32_0 : i32, i32
  }
  func.func @transform_1(%arg0: i32, %arg1: memref<16xi32, #tpu.memory_space<smem>>) -> (i32, i32) {
    %c0_i32 = arith.constant 0 : i32
    %c0_i32_0 = arith.constant 0 : i32
    %c0_i32_1 = arith.constant 0 : i32
    return %c0_i32, %c0_i32_0 : i32, i32
  }
  func.func @transform_2(%arg0: i32, %arg1: memref<16xi32, #tpu.memory_space<smem>>) -> (i32, i32) {
    %c0_i32 = arith.constant 0 : i32
    %c0_i32_0 = arith.constant 0 : i32
    return %arg0, %c0_i32 : i32, i32
  }
}

</mosaic_0001>

<llo_original>
// kernel: tpu_custom_call.1
$region0: #{tpu_custom_call.1}
  #allocation0 [shape = 'u32[]', space=smem, size = 0x4, offset = 0x4, fixed_abs, tag = 'smem constant byte address 0x4 - core index']
  #allocation1 [shape = 'u32[144,128]{1,0:T(1,128)}', space=vmem, size = 0x12000, scoped, tag = 'internal scratch']
  #allocation2 [shape = 's32[1]{0}', space=sflag, size = 0x4, scoped, tag = 'scoped memory for tpu_custom_call.1']
  #allocation3 [shape = 'u8[512]{0}', space=smem, size = 0x200, scoped, tag = 'prefetched SMEM operand 0']
  %s0 = inlined_call_operand.hbm [shape: s32[16], index: 0, kind: input, shape index: {}]
  %s1 = inlined_call_operand.hbm [shape: f32[64,128], index: 1, kind: input, shape index: {}]
  %s2 = inlined_call_operand.hbm [shape: f32[16,128], index: 2, kind: input, shape index: {}]
  %s3 = inlined_call_operand.hbm [shape: f32[16,128], index: 3, kind: output, shape index: {}]
  %s4 = sld [smem:[#allocation0]]
  $region26: #{tpu_custom_call.1} parent=0
    _
  %s6 = ssub.s32 1, %s4
  %s7 = scalar_select 0, %s6, %s4
  %9 = dma.hbm_to_smem %s0, 16, [#allocation3], [#allocation2]
  %10 = dma.done [#allocation2], 16
  %11 = sfence
  $region1: #{tpu_custom_call.1} parent=0
    #allocation4 [shape = 'u8[32768]{0}', space=vmem, size = 0x8000, scoped, tag = 'input window, operand 1, single buffered']
    #allocation5 [shape = 's32[1]{0}', space=sflag, size = 0x4, scoped, tag = 'scoped memory for tpu_custom_call.1']
    #allocation6 [shape = 's32[1]{0}', space=sflag, size = 0x4, scoped, tag = 'scoped memory for tpu_custom_call.1']
    #allocation7 [shape = 'u8[4096]{0}', space=vmem, size = 0x1000, scoped, tag = 'input window, operand 2, single buffered']
    #allocation8 [shape = 's32[1]{0}', space=sflag, size = 0x4, scoped, tag = 'scoped memory for tpu_custom_call.1']
    #allocation9 [shape = 'u8[8192]{0}', space=vmem, size = 0x2000, scoped, tag = 'output window, operand 0, single buffered']
    %12 = vsyncpa [#allocation5], 0
    %13 = vsyncpa [#allocation8], 0
    %14 = vsyncpa [#allocation6], 0
    // Predicated region
    $region2: #{tpu_custom_call.1} parent=1 // pred_check
      _
    $region3: #{tpu_custom_call.1} parent=1 // pred_check_branch
      %16 = sbr.rel (0) target = $region5
    $region4: #{tpu_custom_call.1} parent=1 // pred_region
      %s18 = ssub.s32 1024, 1024
      %19 = vsyncadd [#allocation5], %s18
      %s20 = sshll.u32 [#allocation4], 4
      %s21 = int_to_ptr.vmem [resolvable:$true] %s20
      %26 = dma.hbm_to_vmem [thread:$0]  %s1, 1024, %s21, [#allocation5], 128, 128, 8
    $region5: #{tpu_custom_call.1} parent=1 // pred_fallthru
      _
    // Predicated region
    $region6: #{tpu_custom_call.1} parent=1 // pred_check
      _
    $region7: #{tpu_custom_call.1} parent=1 // pred_check_branch
      %28 = sbr.rel (0) target = $region9
    $region8: #{tpu_custom_call.1} parent=1 // pred_region
      %s30 = ssub.s32 128, 128
      %31 = vsyncadd [#allocation8], %s30
      %s33 = sshll.u32 [#allocation7], 4
      %s34 = int_to_ptr.vmem [resolvable:$true] %s33
      %36 = dma.hbm_to_vmem [thread:$0]  %s2, 128, %s34, [#allocation8]
    $region9: #{tpu_custom_call.1} parent=1 // pred_fallthru
      _
    // Predicated region
    $region10: #{tpu_custom_call.1} parent=1 // pred_check
      _
    $region11: #{tpu_custom_call.1} parent=1 // pred_check_branch
      %38 = sbr.rel (0) target = $region13
    $region12: #{tpu_custom_call.1} parent=1 // pred_region
      %39 = dma.done [#allocation5], 1024
    $region13: #{tpu_custom_call.1} parent=1 // pred_fallthru
      _
    // Predicated region
    $region14: #{tpu_custom_call.1} parent=1 // pred_check
      _
    $region15: #{tpu_custom_call.1} parent=1 // pred_check_branch
      %41 = sbr.rel (0) target = $region17
    $region16: #{tpu_custom_call.1} parent=1 // pred_region
      %42 = dma.done [#allocation8], 128
    $region17: #{tpu_custom_call.1} parent=1 // pred_fallthru
      _
    %s43 = smul.u32 0, 16
    %s44 = sld [smem:[#allocation3 + %s43]]
    %s45 = scalar_lea.vmem [#allocation4], %s44
    %v46 = vld [vmem:[%s45] sm:$0x1]
    %v47 = vld [vmem:[#allocation7] sm:$0x1]
    %v48 = vadd.f32 %v46, %v47
    %49 = vst [vmem:[#allocation9] sm:$0x1] %v48
    %s50 = sadd.s32 %s43, 1
    %s51 = sld [smem:[#allocation3 + %s50]]
    %s52 = scalar_lea.vmem [#allocation4], %s51
    %v53 = vld [vmem:[%s52] sm:$0x1]
    %v54 = vld [vmem:[#allocation7 + $0x1] sm:$0x1]
    %v55 = vadd.f32 %v53, %v54
    %56 = vst [vmem:[#allocation9 + $0x1] sm:$0x1] %v55
    %s57 = sadd.s32 %s43, 2
    %s58 = sld [smem:[#allocation3 + %s57]]
    %s59 = scalar_lea.vmem [#allocation4], %s58
    %v60 = vld [vmem:[%s59] sm:$0x1]
    %v61 = vld [vmem:[#allocation7 + $0x2] sm:$0x1]
    %v62 = vadd.f32 %v60, %v61
    %63 = vst [vmem:[#allocation9 + $0x2] sm:$0x1] %v62
    %s64 = sadd.s32 %s43, 3
    %s65 = sld [smem:[#allocation3 + %s64]]
    %s66 = scalar_lea.vmem [#allocation4], %s65
    %v67 = vld [vmem:[%s66] sm:$0x1]
    %v68 = vld [vmem:[#allocation7 + $0x3] sm:$0x1]
    %v69 = vadd.f32 %v67, %v68
    %70 = vst [vmem:[#allocation9 + $0x3] sm:$0x1] %v69
    %s71 = sadd.s32 %s43, 4
    %s72 = sld [smem:[#allocation3 + %s71]]
    %s73 = scalar_lea.vmem [#allocation4], %s72
    %v74 = vld [vmem:[%s73] sm:$0x1]
    %v75 = vld [vmem:[#allocation7 + $0x4] sm:$0x1]
    %v76 = vadd.f32 %v74, %v75
    %77 = vst [vmem:[#allocation9 + $0x4] sm:$0x1] %v76
    %s78 = sadd.s32 %s43, 5
    %s79 = sld [smem:[#allocation3 + %s78]]
    %s80 = scalar_lea.vmem [#allocation4], %s79
    %v81 = vld [vmem:[%s80] sm:$0x1]
    %v82 = vld [vmem:[#allocation7 + $0x5] sm:$0x1]
    %v83 = vadd.f32 %v81, %v82
    %84 = vst [vmem:[#allocation9 + $0x5] sm:$0x1] %v83
    %s85 = sadd.s32 %s43, 6
    %s86 = sld [smem:[#allocation3 + %s85]]
    %s87 = scalar_lea.vmem [#allocation4], %s86
    %v88 = vld [vmem:[%s87] sm:$0x1]
    %v89 = vld [vmem:[#allocation7 + $0x6] sm:$0x1]
    %v90 = vadd.f32 %v88, %v89
    %91 = vst [vmem:[#allocation9 + $0x6] sm:$0x1] %v90
    %s92 = sadd.s32 %s43, 7
    %s93 = sld [smem:[#allocation3 + %s92]]
    %s94 = scalar_lea.vmem [#allocation4], %s93
    %v95 = vld [vmem:[%s94] sm:$0x1]
    %v96 = vld [vmem:[#allocation7 + $0x7] sm:$0x1]
    %v97 = vadd.f32 %v95, %v96
    %98 = vst [vmem:[#allocation9 + $0x7] sm:$0x1] %v97
    %s99 = sadd.s32 %s43, 8
    %s100 = sld [smem:[#allocation3 + %s99]]
    %s101 = scalar_lea.vmem [#allocation4], %s100
    %v102 = vld [vmem:[%s101] sm:$0x1]
    %v103 = vld [vmem:[#allocation7] sm:$0x1]
    %v104 = vadd.f32 %v102, %v103
    %105 = vst [vmem:[#allocation9 + $0x8] sm:$0x1] %v104
    %s106 = sadd.s32 %s43, 9
    %s107 = sld [smem:[#allocation3 + %s106]]
    %s108 = scalar_lea.vmem [#allocation4], %s107
    %v109 = vld [vmem:[%s108] sm:$0x1]
    %v110 = vld [vmem:[#allocation7 + $0x1] sm:$0x1]
    %v111 = vadd.f32 %v109, %v110
    %112 = vst [vmem:[#allocation9 + $0x9] sm:$0x1] %v111
    %s113 = sadd.s32 %s43, 10
    %s114 = sld [smem:[#allocation3 + %s113]]
    %s115 = scalar_lea.vmem [#allocation4], %s114
    %v116 = vld [vmem:[%s115] sm:$0x1]
    %v117 = vld [vmem:[#allocation7 + $0x2] sm:$0x1]
    %v118 = vadd.f32 %v116, %v117
    %119 = vst [vmem:[#allocation9 + $0xa] sm:$0x1] %v118
    %s120 = sadd.s32 %s43, 11
    %s121 = sld [smem:[#allocation3 + %s120]]
    %s122 = scalar_lea.vmem [#allocation4], %s121
    %v123 = vld [vmem:[%s122] sm:$0x1]
    %v124 = vld [vmem:[#allocation7 + $0x3] sm:$0x1]
    %v125 = vadd.f32 %v123, %v124
    %126 = vst [vmem:[#allocation9 + $0xb] sm:$0x1] %v125
    %s127 = sadd.s32 %s43, 12
    %s128 = sld [smem:[#allocation3 + %s127]]
    %s129 = scalar_lea.vmem [#allocation4], %s128
    %v130 = vld [vmem:[%s129] sm:$0x1]
    %v131 = vld [vmem:[#allocation7 + $0x4] sm:$0x1]
    %v132 = vadd.f32 %v130, %v131
    %133 = vst [vmem:[#allocation9 + $0xc] sm:$0x1] %v132
    %s134 = sadd.s32 %s43, 13
    %s135 = sld [smem:[#allocation3 + %s134]]
    %s136 = scalar_lea.vmem [#allocation4], %s135
    %v137 = vld [vmem:[%s136] sm:$0x1]
    %v138 = vld [vmem:[#allocation7 + $0x5] sm:$0x1]
    %v139 = vadd.f32 %v137, %v138
    %140 = vst [vmem:[#allocation9 + $0xd] sm:$0x1] %v139
    %s141 = sadd.s32 %s43, 14
    %s142 = sld [smem:[#allocation3 + %s141]]
    %s143 = scalar_lea.vmem [#allocation4], %s142
    %v144 = vld [vmem:[%s143] sm:$0x1]
    %v145 = vld [vmem:[#allocation7 + $0x6] sm:$0x1]
    %v146 = vadd.f32 %v144, %v145
    %147 = vst [vmem:[#allocation9 + $0xe] sm:$0x1] %v146
    %s148 = sadd.s32 %s43, 15
    %s149 = sld [smem:[#allocation3 + %s148]]
    %s150 = scalar_lea.vmem [#allocation4], %s149
    %v151 = vld [vmem:[%s150] sm:$0x1]
    %v152 = vld [vmem:[#allocation7 + $0x7] sm:$0x1]
    %v153 = vadd.f32 %v151, %v152
    %154 = vst [vmem:[#allocation9 + $0xf] sm:$0x1] %v153
    // Predicated region
    $region18: #{tpu_custom_call.1} parent=1 // pred_check
      _
    $region19: #{tpu_custom_call.1} parent=1 // pred_check_branch
      %156 = sbr.rel (0) target = $region21
    $region20: #{tpu_custom_call.1} parent=1 // pred_region
      %s158 = ssub.s32 256, 256
      %159 = vsyncadd [#allocation6], %s158
      %s160 = sshll.u32 [#allocation9], 4
      %s161 = int_to_ptr.vmem [resolvable:$true] %s160
      %166 = dma.vmem_to_hbm [thread:$0]  %s161, 256, %s3, [#allocation6], 128, 128, 8
    $region21: #{tpu_custom_call.1} parent=1 // pred_fallthru
      _
    // Predicated region
    $region22: #{tpu_custom_call.1} parent=1 // pred_check
      _
    $region23: #{tpu_custom_call.1} parent=1 // pred_check_branch
      %168 = sbr.rel (0) target = $region25
    $region24: #{tpu_custom_call.1} parent=1 // pred_region
      %169 = dma.done [#allocation6], 256
    $region25: #{tpu_custom_call.1} parent=1 // pred_fallthru
      _
    %170 = vsyncpa [#allocation5], 1
    %171 = vsyncpa [#allocation8], 1
    %172 = vsyncpa [#allocation6], 1

</llo_original>
